<compile_context>
chip_gen: v6e
topology: v6e:2x2x1
jax: 0.10.0
libtpu: 0.0.40
codegen_flags: <defaults>
</compile_context>

<pallas_src>
import jax
import jax.numpy as jnp
from jax.experimental import pallas as pl
from jax.experimental.pallas import tpu as pltpu


# ----------------------------- kernels ---------------------------------------

def conv_stats_kernel(p_ref, w_ref, y_ref, stats_ref):
    """One (G images x TP columns) tile of the conv + fused BN partial sums.

    p_ref:     (G, KCp, TP)   bf16  im2col patch columns
    w_ref:     (Coutp, KCp)   bf16  flattened conv weight
    y_ref:     (G, Coutp, TP) bf16  conv output tile (spatial on lanes)
    stats_ref: (Coutp, 2)     f32   [:,0]=sum(y), [:,1]=sum(y*y) over this tile
    """
    coutp = w_ref.shape[0]
    s1 = jnp.zeros((coutp, 1), jnp.float32)
    s2 = jnp.zeros((coutp, 1), jnp.float32)
    for g in range(p_ref.shape[0]):                      # static, small (usually 1-2)
        y = jnp.dot(w_ref[...], p_ref[g], preferred_element_type=jnp.float32)
        y_ref[g] = y.astype(y_ref.dtype)                 # bf16 intermediate store
        s1 = s1 + jnp.sum(y, axis=1, keepdims=True)
        s2 = s2 + jnp.sum(y * y, axis=1, keepdims=True)
    lane = jax.lax.broadcasted_iota(jnp.int32, (coutp, 2), 1)
    stats_ref[...] = jnp.where(lane == 0, s1, s2)        # one combined store


def bn_relu_kernel(y_ref, scale_ref, shift_ref, o_ref):
    """relu(y * scale + shift) with precomputed per-channel scale/shift, NCHW layout."""
    scale = scale_ref[...]                               # (Coutp, 1) f32
    shift = shift_ref[...]
    for g in range(y_ref.shape[0]):                      # static, small
        y = y_ref[g].astype(jnp.float32)
        o_ref[g] = jnp.maximum(y * scale + shift, 0.0).astype(o_ref.dtype)


# ----------------------------- tiling helpers ---------------------------------

def _divisors(n):
    ds = set()
    i = 1
    while i * i <= n:
        if n % i == 0:
            ds.add(i)
            ds.add(n // i)
        i += 1
    return sorted(ds)


def _round_up(x, m):
    return ((x + m - 1) // m) * m


def _vmem_limit_bytes():
    """Generation-aware VMEM limit: ~48 MiB on v7x (64 MiB/TC), up to 96 MiB on v5e/v6e."""
    cap = 64 * 1024 * 1024                               # safe default = v7x per-TC VMEM
    try:
        cap = int(pltpu.get_tpu_info().vmem_capacity_bytes)
    except Exception:
        pass
    return int(min(cap * 3 // 4, 96 * 1024 * 1024))


def _choose_tiling(N, OHW, kc_p, cout_p, vmem_limit, min_steps=4):
    """Pick (G images per block, TP columns per block) from a VMEM budget.

    Per-column live bytes (double-buffered), worst of the two passes:
      pass 1: bf16 patches (2*kc_p) + bf16 conv_out (2*cout_p)
      pass 2: bf16 conv_out (2*cout_p) + f32 output (4*cout_p)
    """
    per_col = 2 * max(2 * kc_p + 2 * cout_p, 6 * cout_p)
    fixed = 2 * (cout_p * kc_p * 2) + (256 << 10)        # weight dbuf + scalars slack
    budget = min(max(vmem_limit // 2, 4 << 20), 40 << 20)
    cols_cap = max(OHW if OHW < 128 else 128, (budget - fixed) // per_col)

    if OHW >= 128:
        # one image (or a slice of one) per block; keep >= min_steps total grid steps
        cap = min(cols_cap, max(128, (N * OHW) // min_steps))
        pref = [d for d in _divisors(OHW) if d % 128 == 0 and d <= cap]
        # TODO(synk): if OHW has no 128-multiple divisor we fall back to full rows,
        # which for very large ragged OHW can exceed the VMEM budget.
        tp = max(pref) if pref else OHW
        return 1, tp

    # Small spatial extent: whole image per block, group several images per block
    # (fewer grid steps / bigger DMAs; the NCHW lane width is OHW either way).
    fitting = [g for g in _divisors(N) if g * OHW <= cols_cap]
    grouped = [g for g in fitting if g * OHW >= 128]
    g = min(grouped) if grouped else (max(fitting) if fitting else 1)
    return g, OHW


# ----------------------------- wrapper ----------------------------------------

def encoder_module_forward(x_nchw, w, b, gamma, beta, *, stride, pad, eps=1e-5):
    """Conv2d + BatchNorm2d (training-mode batch statistics) + ReLU, NCHW in/out."""
    N, Cin, H, W = x_nchw.shape
    Cout, _, KH, KW = w.shape
    OH = (H + 2 * pad - KH) // stride + 1
    OW = (W + 2 * pad - KW) // stride + 1
    OHW = OH * OW
    KC = Cin * KH * KW
    KC_p = _round_up(KC, 16)                             # bf16 sublane pack
    Cout_p = _round_up(Cout, 8)
    f32 = jnp.float32

    vmem_limit = _vmem_limit_bytes()
    G, TP = _choose_tiling(N, OHW, KC_p, Cout_p, vmem_limit)
    NB, NI = N // G, OHW // TP
    NT = NB * NI

    # --- glue: build the (N, KC_p, OH*OW) patch slab once; read once by pass 1 ---
    xpad = jnp.pad(x_nchw, ((0, 0), (0, 0), (pad, pad), (pad, pad)))
    taps = []
    for kh in range(KH):
        for kw in range(KW):
            sl = jax.lax.slice(
                xpad,
                (0, 0, kh, kw),
                (N, Cin, kh + (OH - 1) * stride + 1, kw + (OW - 1) * stride + 1),
                (1, 1, stride, stride),
            )                                            # (N, Cin, OH, OW)
            taps.append(sl.reshape(N, Cin, OHW))
    # contraction row order = (cin, kh, kw) -> matches w.reshape(Cout, Cin*KH*KW)
    patches = jnp.stack(taps, axis=2).reshape(N, KC, OHW).astype(jnp.bfloat16)
    if KC_p > KC:
        patches = jnp.pad(patches, ((0, 0), (0, KC_p - KC), (0, 0)))
    w_flat = jnp.pad(w.reshape(Cout, KC).astype(jnp.bfloat16),
                     ((0, Cout_p - Cout), (0, KC_p - KC)))
    # Conv bias is dropped: train-mode BN subtracts the batch mean, so the bias
    # cancels exactly in the returned tensor (running stats are not materialized).
    del b

    cparams = pltpu.CompilerParams(
        dimension_semantics=("parallel", "parallel"),
        vmem_limit_bytes=vmem_limit,
    )

    # --- pass 1: conv (MXU, f32 accumulate) + fused per-tile BN partial sums ---
    conv_out, stats = pl.pallas_call(
        conv_stats_kernel,
        out_shape=(jax.ShapeDtypeStruct((N, Cout_p, OHW), jnp.bfloat16),
                   jax.ShapeDtypeStruct((NT, Cout_p, 2), f32)),
        grid_spec=pltpu.PrefetchScalarGridSpec(
            num_scalar_prefetch=0,
            grid=(NB, NI),
            in_specs=[
                pl.BlockSpec((G, KC_p, TP), lambda i, j: (i, 0, j)),
                pl.BlockSpec((Cout_p, KC_p), lambda i, j: (0, 0)),
            ],
            out_specs=[
                pl.BlockSpec((G, Cout_p, TP), lambda i, j: (i, 0, j)),
                pl.BlockSpec((None, Cout_p, 2), lambda i, j: (i * NI + j, 0, 0)),
            ],
        ),
        compiler_params=cparams,
    )(patches, w_flat)

    # --- glue: exact batch statistics from per-tile partial sums (tiny arrays) ---
    s1 = jnp.sum(stats[:, :, 0], axis=0)                 # (Cout_p,) sum(y)
    s2 = jnp.sum(stats[:, :, 1], axis=0)                 # (Cout_p,) sum(y*y)
    cnt = jnp.float32(N * OHW)
    mean = s1 / cnt
    var = jnp.maximum(s2 / cnt - mean * mean, 0.0)       # biased var (BN train mode)
    gamma_p = jnp.pad(gamma.astype(f32), (0, Cout_p - Cout), constant_values=1.0)
    beta_p = jnp.pad(beta.astype(f32), (0, Cout_p - Cout))
    scale = gamma_p * jax.lax.rsqrt(var + jnp.float32(eps))
    shift = beta_p - mean * scale

    # --- pass 2: normalize + affine + relu, written directly in NCHW layout ---
    out_slab = pl.pallas_call(
        bn_relu_kernel,
        out_shape=jax.ShapeDtypeStruct((N, Cout_p, OHW), f32),
        grid_spec=pltpu.PrefetchScalarGridSpec(
            num_scalar_prefetch=0,
            grid=(NB, NI),
            in_specs=[
                pl.BlockSpec((G, Cout_p, TP), lambda i, j: (i, 0, j)),
                pl.BlockSpec((Cout_p, 1), lambda i, j: (0, 0)),
                pl.BlockSpec((Cout_p, 1), lambda i, j: (0, 0)),
            ],
            out_specs=pl.BlockSpec((G, Cout_p, TP), lambda i, j: (i, 0, j)),
        ),
        compiler_params=cparams,
    )(conv_out, scale.reshape(Cout_p, 1), shift.reshape(Cout_p, 1))

    out = out_slab[:, :Cout, :] if Cout_p > Cout else out_slab
    return out.reshape(N, Cout, OH, OW)                  # free reshape, no transpose


# ----------------------------- main -------------------------------------------

if __name__ == "__main__":
    key = jax.random.PRNGKey(0)
    k1, k2, k3, k4, k5 = jax.random.split(key, 5)

    # Conv2d(4 -> 8, kernel=3, pad=1, stride=2), batch=2, spatial=16
    N, Cin, H, W = 2, 4, 16, 16
    Cout, KH, KW = 8, 3, 3
    stride, pad = 2, 1

    x = jax.random.normal(k1, (N, Cin, H, W), jnp.float32)
    w = 0.1 * jax.random.normal(k2, (Cout, Cin, KH, KW), jnp.float32)
    b = 0.1 * jax.random.normal(k3, (Cout,), jnp.float32)
    gamma = 1.0 + 0.1 * jax.random.normal(k4, (Cout,), jnp.float32)
    beta = 0.1 * jax.random.normal(k5, (Cout,), jnp.float32)

    out = encoder_module_forward(x, w, b, gamma, beta, stride=stride, pad=pad)
    out = jax.block_until_ready(out)

    # Pure-JAX fp32 reference (PyTorch train-mode BN semantics, bias included; the
    # bias cancels mathematically so the kernel matches despite dropping it).
    conv_ref = jax.lax.conv_general_dilated(
        x, w, window_strides=(stride, stride),
        padding=((pad, pad), (pad, pad)),
        dimension_numbers=("NCHW", "OIHW", "NCHW"),
        precision=jax.lax.Precision.HIGHEST,
    ) + b[None, :, None, None]
    m_ref = jnp.mean(conv_ref, axis=(0, 2, 3), keepdims=True)
    v_ref = jnp.mean((conv_ref - m_ref) ** 2, axis=(0, 2, 3), keepdims=True)
    ref = jnp.maximum(
        (conv_ref - m_ref) * jax.lax.rsqrt(v_ref + 1e-5)
        * gamma[None, :, None, None] + beta[None, :, None, None],
        0.0,
    )

    assert out.shape == ref.shape == (N, Cout, H // stride, W // stride)
    assert bool(jnp.allclose(out, ref, atol=3e-2, rtol=3e-2))
    print("KERNEL_OK")
</pallas_src>

<mosaic_0001>
module attributes {stable_mosaic.version = 11 : i64} {
  func.func @conv_stats_kernel(%arg0: i32, %arg1: i32, %arg2: memref<2x48x64xbf16, #tpu.memory_space<vmem>>, %arg3: memref<8x48xbf16, #tpu.memory_space<vmem>>, %arg4: memref<2x8x64xbf16, #tpu.memory_space<vmem>>, %arg5: memref<1x8x2xf32, #tpu.memory_space<vmem>>) attributes {dimension_semantics = [#tpu.dimension_semantics<parallel>, #tpu.dimension_semantics<parallel>], iteration_bounds = array<i64: 1, 1>, scalar_prefetch = 0 : i64, scratch_operands = 0 : i64, tpu.core_type = #tpu.core_type<tc>, window_params = [{transform_indices = @transform_0, window_bounds = array<i64: 2, 48, 64>}, {pipeline_mode = #tpu.pipeline_mode<synchronous>, transform_indices = @transform_1, window_bounds = array<i64: 8, 48>}, {transform_indices = @transform_2, window_bounds = array<i64: 2, 8, 64>}, {transform_indices = @transform_3, window_bounds = array<i64: 1, 8, 2>}]} {
    %cst = arith.constant 0.000000e+00 : f32
    %0 = vector.broadcast %cst : f32 to vector<8x1xf32>
    %cst_0 = arith.constant 0.000000e+00 : f32
    %1 = vector.broadcast %cst_0 : f32 to vector<8x1xf32>
    %c0 = arith.constant 0 : index
    %c0_1 = arith.constant 0 : index
    %2 = vector.load %arg3[%c0, %c0_1] : memref<8x48xbf16, #tpu.memory_space<vmem>>, vector<8x48xbf16>
    %c0_2 = arith.constant 0 : index
    %c0_3 = arith.constant 0 : index
    %c0_4 = arith.constant 0 : index
    %3 = vector.load %arg2[%c0_2, %c0_3, %c0_4] : memref<2x48x64xbf16, #tpu.memory_space<vmem>>, vector<1x48x64xbf16>
    %4 = vector.shape_cast %3 : vector<1x48x64xbf16> to vector<48x64xbf16>
    %cst_5 = arith.constant dense<0.000000e+00> : vector<8x64xf32>
    %5 = tpu.matmul %2, %4, %cst_5 {dimension_numbers = #tpu.dot_dimension_numbers<[1], [0], [0], [1], [0, 0, 1, 1], [], []>} : vector<8x48xbf16>, vector<48x64xbf16>, vector<8x64xf32> -> vector<8x64xf32>
    %6 = arith.truncf %5 : vector<8x64xf32> to vector<8x64xbf16>
    %c0_6 = arith.constant 0 : index
    %c0_7 = arith.constant 0 : index
    %c0_8 = arith.constant 0 : index
    %7 = vector.load %arg4[%c0_6, %c0_7, %c0_8] : memref<2x8x64xbf16, #tpu.memory_space<vmem>>, vector<1x8x64xbf16>
    %8 = vector.shape_cast %7 : vector<1x8x64xbf16> to vector<8x64xbf16>
    %9 = vector.shape_cast %6 : vector<8x64xbf16> to vector<1x8x64xbf16>
    tpu.vector_store %arg4[%c0_6, %c0_7, %c0_8], %9 {strides = array<i32>} : memref<2x8x64xbf16, #tpu.memory_space<vmem>>, vector<1x8x64xbf16>,
    %cst_9 = arith.constant dense<0.000000e+00> : vector<8xf32>
    %10 = vector.multi_reduction <add>, %5, %cst_9 [1] : vector<8x64xf32> to vector<8xf32>
    %11 = vector.shape_cast %10 : vector<8xf32> to vector<8x1xf32>
    %12 = arith.addf %0, %11 : vector<8x1xf32>
    %13 = arith.mulf %5, %5 : vector<8x64xf32>
    %cst_10 = arith.constant dense<0.000000e+00> : vector<8xf32>
    %14 = vector.multi_reduction <add>, %13, %cst_10 [1] : vector<8x64xf32> to vector<8xf32>
    %15 = vector.shape_cast %14 : vector<8xf32> to vector<8x1xf32>
    %16 = arith.addf %1, %15 : vector<8x1xf32>
    %c0_11 = arith.constant 0 : index
    %c0_12 = arith.constant 0 : index
    %17 = vector.load %arg3[%c0_11, %c0_12] : memref<8x48xbf16, #tpu.memory_space<vmem>>, vector<8x48xbf16>
    %c1 = arith.constant 1 : index
    %c0_13 = arith.constant 0 : index
    %c0_14 = arith.constant 0 : index
    %18 = vector.load %arg2[%c1, %c0_13, %c0_14] : memref<2x48x64xbf16, #tpu.memory_space<vmem>>, vector<1x48x64xbf16>
    %19 = vector.shape_cast %18 : vector<1x48x64xbf16> to vector<48x64xbf16>
    %cst_15 = arith.constant dense<0.000000e+00> : vector<8x64xf32>
    %20 = tpu.matmul %17, %19, %cst_15 {dimension_numbers = #tpu.dot_dimension_numbers<[1], [0], [0], [1], [0, 0, 1, 1], [], []>} : vector<8x48xbf16>, vector<48x64xbf16>, vector<8x64xf32> -> vector<8x64xf32>
    %21 = arith.truncf %20 : vector<8x64xf32> to vector<8x64xbf16>
    %c1_16 = arith.constant 1 : index
    %c0_17 = arith.constant 0 : index
    %c0_18 = arith.constant 0 : index
    %22 = vector.load %arg4[%c1_16, %c0_17, %c0_18] : memref<2x8x64xbf16, #tpu.memory_space<vmem>>, vector<1x8x64xbf16>
    %23 = vector.shape_cast %22 : vector<1x8x64xbf16> to vector<8x64xbf16>
    %24 = vector.shape_cast %21 : vector<8x64xbf16> to vector<1x8x64xbf16>
    tpu.vector_store %arg4[%c1_16, %c0_17, %c0_18], %24 {strides = array<i32>} : memref<2x8x64xbf16, #tpu.memory_space<vmem>>, vector<1x8x64xbf16>,
    %cst_19 = arith.constant dense<0.000000e+00> : vector<8xf32>
    %25 = vector.multi_reduction <add>, %20, %cst_19 [1] : vector<8x64xf32> to vector<8xf32>
    %26 = vector.shape_cast %25 : vector<8xf32> to vector<8x1xf32>
    %27 = arith.addf %12, %26 : vector<8x1xf32>
    %28 = arith.mulf %20, %20 : vector<8x64xf32>
    %cst_20 = arith.constant dense<0.000000e+00> : vector<8xf32>
    %29 = vector.multi_reduction <add>, %28, %cst_20 [1] : vector<8x64xf32> to vector<8xf32>
    %30 = vector.shape_cast %29 : vector<8xf32> to vector<8x1xf32>
    %31 = arith.addf %16, %30 : vector<8x1xf32>
    %32 = tpu.iota {dimensions = array<i32: 1>} : vector<8x2xi32>
    %c0_i32 = arith.constant 0 : i32
    %33 = vector.broadcast %c0_i32 : i32 to vector<8x2xi32>
    %34 = arith.cmpi eq, %32, %33 : vector<8x2xi32>
    %35 = vector.shape_cast %27 : vector<8x1xf32> to vector<8x1xf32>
    %36 = vector.broadcast %35 : vector<8x1xf32> to vector<8x2xf32>
    %37 = vector.shape_cast %31 : vector<8x1xf32> to vector<8x1xf32>
    %38 = vector.broadcast %37 : vector<8x1xf32> to vector<8x2xf32>
    %39 = arith.select %34, %36, %38 : vector<8x2xi1>, vector<8x2xf32>
    %c0_21 = arith.constant 0 : index
    %c0_22 = arith.constant 0 : index
    %c0_23 = arith.constant 0 : index
    %40 = vector.load %arg5[%c0_21, %c0_22, %c0_23] : memref<1x8x2xf32, #tpu.memory_space<vmem>>, vector<1x8x2xf32>
    %41 = vector.shape_cast %40 : vector<1x8x2xf32> to vector<8x2xf32>
    %42 = vector.shape_cast %39 : vector<8x2xf32> to vector<1x8x2xf32>
    tpu.vector_store %arg5[%c0_21, %c0_22, %c0_23], %42 {strides = array<i32>} : memref<1x8x2xf32, #tpu.memory_space<vmem>>, vector<1x8x2xf32>,
    return
  }
  func.func @transform_0(%arg0: i32, %arg1: i32) -> (i32, i32, i32) {
    %c0_i32 = arith.constant 0 : i32
    %c0_i32_0 = arith.constant 0 : i32
    return %arg0, %c0_i32, %arg1 : i32, i32, i32
  }
  func.func @transform_1(%arg0: i32, %arg1: i32) -> (i32, i32) {
    %c0_i32 = arith.constant 0 : i32
    %c0_i32_0 = arith.constant 0 : i32
    %c0_i32_1 = arith.constant 0 : i32
    return %c0_i32, %c0_i32_0 : i32, i32
  }
  func.func @transform_2(%arg0: i32, %arg1: i32) -> (i32, i32, i32) {
    %c0_i32 = arith.constant 0 : i32
    %c0_i32_0 = arith.constant 0 : i32
    return %arg0, %c0_i32, %arg1 : i32, i32, i32
  }
  func.func @transform_3(%arg0: i32, %arg1: i32) -> (i32, i32, i32) {
    %c1_i32 = arith.constant 1 : i32
    %0 = arith.muli %arg0, %c1_i32 : i32
    %1 = arith.addi %0, %arg1 : i32
    %c0_i32 = arith.constant 0 : i32
    %c0_i32_0 = arith.constant 0 : i32
    %c0_i32_1 = arith.constant 0 : i32
    return %1, %c0_i32, %c0_i32_0 : i32, i32, i32
  }
}

</mosaic_0001>

<llo_original>
// kernel: tpu_custom_call.1
$region0: #{tpu_custom_call.1}
  #allocation0 [shape = 'u32[]', space=smem, size = 0x4, offset = 0x4, fixed_abs, tag = 'smem constant byte address 0x4 - core index']
  #allocation1 [shape = 'u32[144,128]{1,0:T(1,128)}', space=vmem, size = 0x12000, scoped, tag = 'internal scratch']
  %s0 = inlined_call_operand.hbm [shape: bf16[2,48,64], index: 0, kind: input, shape index: {}]
  %s1 = inlined_call_operand.hbm [shape: bf16[8,48], index: 1, kind: input, shape index: {}]
  %s2 = inlined_call_operand.hbm [shape: bf16[2,8,64], index: 2, kind: output, shape index: {0}]
  %s3 = inlined_call_operand.vmem [shape: f32[1,8,2], index: 3, kind: output, shape index: {1}]
  %4 = xla_tuple %s2, %s3
  %s5 = sld [smem:[#allocation0]]
  $region34: #{tpu_custom_call.1} parent=0
    _
  %s7 = ssub.s32 1, %s5
  %s8 = scalar_select 0, %s7, %s5
  $region1: #{tpu_custom_call.1} parent=0
    #allocation2 [shape = 'u8[24576]{0}', space=vmem, size = 0x6000, scoped, tag = 'input window, operand 0, single buffered']
    #allocation3 [shape = 's32[1]{0}', space=sflag, size = 0x4, scoped, tag = 'scoped memory for tpu_custom_call.1']
    #allocation4 [shape = 's32[1]{0}', space=sflag, size = 0x4, scoped, tag = 'scoped memory for tpu_custom_call.1']
    #allocation5 [shape = 'u8[2048]{0}', space=vmem, size = 0x800, scoped, tag = 'input window, operand 1, single buffered']
    #allocation6 [shape = 's32[1]{0}', space=sflag, size = 0x4, scoped, tag = 'scoped memory for tpu_custom_call.1']
    #allocation7 [shape = 'u8[4096]{0}', space=vmem, size = 0x1000, scoped, tag = 'output window, operand 0, single buffered']
    %9 = vsyncpa [#allocation3], 0
    %10 = vsyncpa [#allocation6], 0
    %11 = vsyncpa [#allocation4], 0
    // Predicated region
    $region2: #{tpu_custom_call.1} parent=1 // pred_check
      _
    $region3: #{tpu_custom_call.1} parent=1 // pred_check_branch
      %13 = sbr.rel (0) target = $region5
    $region4: #{tpu_custom_call.1} parent=1 // pred_region
      %s15 = ssub.s32 768, 768
      %16 = vsyncadd [#allocation3], %s15
      %s17 = sshll.u32 [#allocation2], 4
      %s18 = int_to_ptr.vmem [resolvable:$true] %s17
      %23 = dma.hbm_to_vmem [thread:$0]  %s0, 768, %s18, [#allocation3], 64, 64, 4
    $region5: #{tpu_custom_call.1} parent=1 // pred_fallthru
      _
    // Predicated region
    $region6: #{tpu_custom_call.1} parent=1 // pred_check
      _
    $region7: #{tpu_custom_call.1} parent=1 // pred_check_branch
      %25 = sbr.rel (0) target = $region9
    $region8: #{tpu_custom_call.1} parent=1 // pred_region
      %s27 = ssub.s32 64, 64
      %28 = vsyncadd [#allocation6], %s27
      %s30 = sshll.u32 [#allocation5], 4
      %s31 = int_to_ptr.vmem [resolvable:$true] %s30
      %33 = dma.hbm_to_vmem [thread:$0]  %s1, 64, %s31, [#allocation6]
    $region9: #{tpu_custom_call.1} parent=1 // pred_fallthru
      _
    // Predicated region
    $region10: #{tpu_custom_call.1} parent=1 // pred_check
      _
    $region11: #{tpu_custom_call.1} parent=1 // pred_check_branch
      %35 = sbr.rel (0) target = $region13
    $region12: #{tpu_custom_call.1} parent=1 // pred_region
      %36 = dma.done [#allocation3], 768
    $region13: #{tpu_custom_call.1} parent=1 // pred_fallthru
      _
    // Predicated region
    $region14: #{tpu_custom_call.1} parent=1 // pred_check
      _
    $region15: #{tpu_custom_call.1} parent=1 // pred_check_branch
      %38 = sbr.rel (0) target = $region17
    $region16: #{tpu_custom_call.1} parent=1 // pred_region
      %39 = dma.done [#allocation6], 64
    $region17: #{tpu_custom_call.1} parent=1 // pred_fallthru
      _
    %s40 = sadd.s32 0, 0
    %p41 = scmp.lt.s32.totalorder %s40, 0
    %s42 = scalar_select %p41, %s40, 0
    %s43 = smul.addr %s42, 8
    %s44 = scalar_lea.vmem %s3, %s43
    %s45 = sadd.s32 0, 0
    %p46 = scmp.lt.s32.totalorder %s45, 0
    %s47 = scalar_select %p46, %s45, 0
    %s48 = smul.addr %s47, 8
    %s49 = scalar_lea.vmem %s3, %s48
    %s50 = sadd.s32 0, 0
    %v52 = vld [vmem:[#allocation5] sm:$0xf]
    %v53 = vld [vmem:[#allocation2] sm:$0xf]
    %v54 = vld [vmem:[#allocation2 + $0x4] sm:$0xf]
    %v55 = vld [vmem:[#allocation2 + $0x8] sm:$0xf]
    %v56 = vld [vmem:[#allocation2 + $0xc] sm:$0xf]
    %v57 = vld [vmem:[#allocation2 + $0x10] sm:$0xf]
    %v58 = vld [vmem:[#allocation2 + $0x14] sm:$0xf]
    %v65 = vunpack.c.l.b16 %v53
    %v66 = vunpack.c.l.b16 %v54
    %v67 = vunpack.c.l.b16 %v55
    %v68 = vunpack.c.l.b16 %v56
    %v69 = vunpack.c.l.b16 %v57
    %v70 = vunpack.c.l.b16 %v58
    %v71 = vpack.c.b16 %v66, %v65
    %v72 = vpack.c.b16 %v68, %v67
    %v73 = vpack.c.b16 %v70, %v69
    %vm77 = vcmask 392192
    %v79 = vsel %vm77, %v52, 0
    %81 = vmatprep.subr.bf16.mxu0 0
    %82 = vmatpush1.bf16.msra.mxu0 0
    %83 = vmatprep.subr.bf16.mxu0 0
    %84 = vmatpush1.bf16.msra.mxu0 0
    %85 = vmatprep.subr.bf16.mxu0 0
    %86 = vmatpush1.bf16.msra.mxu0 0
    %87 = vmatprep.subr.bf16.mxu0 0
    %88 = vmatpush1.bf16.msra.mxu0 0
    %89 = vmatprep.subr.bf16.mxu0 0
    %90 = vmatpush1.bf16.msra.mxu0 0
    %91 = vmatprep.subr.bf16.mxu0 0
    %92 = vmatpush1.bf16.msra.mxu0 %v73
    %93 = vmatprep.subr.bf16.mxu0 0
    %94 = vmatpush1.bf16.msra.mxu0 %v72
    %95 = vmatprep.subr.bf16.mxu0 0
    %96 = vmatpush1.bf16.msra.mxu0 %v71
    %97 = vmatprep.subr.bf16.mxu0 0
    %98 = vmatpush2.bf16.msra.mxu0 0
    %99 = vmatprep.subr.bf16.mxu0 0
    %100 = vmatpush2.bf16.msra.mxu0 0
    %101 = vmatprep.subr.bf16.mxu0 0
    %102 = vmatpush2.bf16.msra.mxu0 0
    %103 = vmatprep.subr.bf16.mxu0 0
    %104 = vmatpush2.bf16.msra.mxu0 0
    %105 = vmatprep.subr.bf16.mxu0 0
    %106 = vmatpush2.bf16.msra.mxu0 0
    %107 = vmatprep.subr.bf16.mxu0 0
    %108 = vmatpush2.bf16.msra.mxu0 0
    %109 = vmatprep.subr.bf16.mxu0 0
    %110 = vmatpush2.bf16.msra.mxu0 0
    %111 = vmatprep.subr.bf16.mxu0 0
    %112 = vmatpush2.bf16.msra.mxu0 0
    %113 = vmatprep.mubr.bf16.mxu0 0
    %114 = vmatmul.mubr.bf16.gmra.mxu0 %v79
    %v115 = vpop.f32.mrf.mxu0
    %v116 = vadd.f32 0.0, %v115
    %v117 = vpop.f32.mrf.mxu0
    %v118 = vpop.f32.mrf.mxu0
    %v119 = vpop.f32.mrf.mxu0
    %120 = vdwg.mxu0
    %v121 = vpack.c.bf16 %v116, %v116
    %vm122 = vcmask 519168
    %123 = vst.msk [vmem:[#allocation7] sm:$0xf] %vm122, %v121
    %vm124 = vcmask 523264
    %v125 = vsel %vm124, %v116, 0.0
    %126 = vadd.xlane.f32.xlu0 %v125
    %v127 = vpop.xlane.xlu0 %126
    %v128 = vadd.f32 %v127, 0.0
    %v129 = vmul.f32 %v116, %v116
    %v130 = vsel %vm124, %v129, 0.0
    %131 = vadd.xlane.f32.xlu0 %v130
    %v132 = vpop.xlane.xlu0 %131
    %v133 = vadd.f32 %v132, 0.0
    %v134 = vld [vmem:[#allocation5] sm:$0xf]
    %s135 = scalar_lea.vmem [#allocation2], 24
    %v136 = vld [vmem:[%s135] sm:$0xf]
    %v137 = vld [vmem:[%s135 + $0x4] sm:$0xf]
    %v138 = vld [vmem:[%s135 + $0x8] sm:$0xf]
    %v139 = vld [vmem:[%s135 + $0xc] sm:$0xf]
    %v140 = vld [vmem:[%s135 + $0x10] sm:$0xf]
    %v141 = vld [vmem:[%s135 + $0x14] sm:$0xf]
    %v148 = vunpack.c.l.b16 %v136
    %v149 = vunpack.c.l.b16 %v137
    %v150 = vunpack.c.l.b16 %v138
    %v151 = vunpack.c.l.b16 %v139
    %v152 = vunpack.c.l.b16 %v140
    %v153 = vunpack.c.l.b16 %v141
    %v154 = vpack.c.b16 %v149, %v148
    %v155 = vpack.c.b16 %v151, %v150
    %v156 = vpack.c.b16 %v153, %v152
    %v161 = vsel %vm77, %v134, 0
    %163 = vmatprep.subr.bf16.mxu0 0
    %164 = vmatpush1.bf16.msra.mxu0 0
    %165 = vmatprep.subr.bf16.mxu0 0
    %166 = vmatpush1.bf16.msra.mxu0 0
    %167 = vmatprep.subr.bf16.mxu0 0
    %168 = vmatpush1.bf16.msra.mxu0 0
    %169 = vmatprep.subr.bf16.mxu0 0
    %170 = vmatpush1.bf16.msra.mxu0 0
    %171 = vmatprep.subr.bf16.mxu0 0
    %172 = vmatpush1.bf16.msra.mxu0 0
    %173 = vmatprep.subr.bf16.mxu0 0
    %174 = vmatpush1.bf16.msra.mxu0 %v156
    %175 = vmatprep.subr.bf16.mxu0 0
    %176 = vmatpush1.bf16.msra.mxu0 %v155
    %177 = vmatprep.subr.bf16.mxu0 0
    %178 = vmatpush1.bf16.msra.mxu0 %v154
    %179 = vmatprep.subr.bf16.mxu0 0
    %180 = vmatpush2.bf16.msra.mxu0 0
    %181 = vmatprep.subr.bf16.mxu0 0
    %182 = vmatpush2.bf16.msra.mxu0 0
    %183 = vmatprep.subr.bf16.mxu0 0
    %184 = vmatpush2.bf16.msra.mxu0 0
    %185 = vmatprep.subr.bf16.mxu0 0
    %186 = vmatpush2.bf16.msra.mxu0 0
    %187 = vmatprep.subr.bf16.mxu0 0
    %188 = vmatpush2.bf16.msra.mxu0 0
    %189 = vmatprep.subr.bf16.mxu0 0
    %190 = vmatpush2.bf16.msra.mxu0 0
    %191 = vmatprep.subr.bf16.mxu0 0
    %192 = vmatpush2.bf16.msra.mxu0 0
    %193 = vmatprep.subr.bf16.mxu0 0
    %194 = vmatpush2.bf16.msra.mxu0 0
    %195 = vmatprep.mubr.bf16.mxu0 0
    %196 = vmatmul.mubr.bf16.gmra.mxu0 %v161
    %v197 = vpop.f32.mrf.mxu0
    %v198 = vadd.f32 0.0, %v197
    %v199 = vpop.f32.mrf.mxu0
    %v200 = vpop.f32.mrf.mxu0
    %v201 = vpop.f32.mrf.mxu0
    %202 = vdwg.mxu0
    %v203 = vpack.c.bf16 %v198, %v198
    %s204 = scalar_lea.vmem [#allocation7], 4
    %205 = vst.msk [vmem:[%s204] sm:$0xf] %vm122, %v203
    %v206 = vsel %vm124, %v198, 0.0
    %207 = vadd.xlane.f32.xlu0 %v206
    %v208 = vpop.xlane.xlu0 %207
    %v209 = vadd.f32 %v128, %v208
    %v210 = vmul.f32 %v198, %v198
    %v211 = vsel %vm124, %v210, 0.0
    %212 = vadd.xlane.f32.xlu0 %v211
    %v213 = vpop.xlane.xlu0 %212
    %v214 = vadd.f32 %v133, %v213
    %v215 = vlaneseq
    %v216 = vand.u32 %v215, 127
    %vm217 = vcmp.eq.s32.totalorder %v216, 0
    %v218 = vsel %vm217, %v209, %v214
    %vm219 = vcmask 15360
    %220 = vst.msk [vmem:[%s49] sm:$0xff] %vm219, %v218
    %s221 = sadd.s32 0, 0
    %p222 = scmp.lt.s32.totalorder %s221, 0
    %s223 = scalar_select %p222, %s221, 0
    %s224 = smul.addr %s223, 8
    %s225 = scalar_lea.vmem %s3, %s224
    // Predicated region
    $region18: #{tpu_custom_call.1} parent=1 // pred_check
      _
    $region19: #{tpu_custom_call.1} parent=1 // pred_check_branch
      %227 = sbr.rel (0) target = $region21
    $region20: #{tpu_custom_call.1} parent=1 // pred_region
      %s229 = ssub.s32 128, 128
      %230 = vsyncadd [#allocation4], %s229
      %s231 = sshll.u32 [#allocation7], 4
      %s232 = int_to_ptr.vmem [resolvable:$true] %s231
      %237 = dma.vmem_to_hbm [thread:$0]  %s232, 128, %s2, [#allocation4], 64, 64, 4
    $region21: #{tpu_custom_call.1} parent=1 // pred_fallthru
      _
    // Predicated region
    $region22: #{tpu_custom_call.1} parent=1 // pred_check
      _
    $region23: #{tpu_custom_call.1} parent=1 // pred_check_branch
      %239 = sbr.rel (0) target = $region25
    $region24: #{tpu_custom_call.1} parent=1 // pred_region
      %s240 = sadd.s32 0, 0
    $region25: #{tpu_custom_call.1} parent=1 // pred_fallthru
      _
    // Predicated region
    $region26: #{tpu_custom_call.1} parent=1 // pred_check
      _
    $region27: #{tpu_custom_call.1} parent=1 // pred_check_branch
      %242 = sbr.rel (0) target = $region29
    $region28: #{tpu_custom_call.1} parent=1 // pred_region
      %243 = dma.done [#allocation4], 128
    $region29: #{tpu_custom_call.1} parent=1 // pred_fallthru
      _
    // Predicated region
    $region30: #{tpu_custom_call.1} parent=1 // pred_check
      _
    $region31: #{tpu_custom_call.1} parent=1 // pred_check_branch
      %245 = sbr.rel (0) target = $region33
    $region32: #{tpu_custom_call.1} parent=1 // pred_region
      %s246 = sadd.s32 0, 0
      %p247 = scmp.lt.s32.totalorder %s246, 0
      %s248 = scalar_select %p247, %s246, 0
      %s249 = smul.addr %s248, 8
      %s250 = scalar_lea.vmem %s3, %s249
    $region33: #{tpu_custom_call.1} parent=1 // pred_fallthru
      _
    %251 = vsyncpa [#allocation3], 1
    %252 = vsyncpa [#allocation6], 1
    %253 = vsyncpa [#allocation4], 1

</llo_original>
